<compile_context>
chip_gen: v7x
topology: tpu7x:2x2x1
jax: 0.10.0
libtpu: 0.0.40
codegen_flags: <defaults>
</compile_context>

<pallas_src>
import jax
import jax.numpy as jnp
from jax.experimental import pallas as pl
from jax.experimental.pallas import tpu as pltpu


def _space_to_depth_kernel(x_ref, sh_ref, swt_ref, o_ref):
    # x_ref:   (1, Cb, H,  W)   input slab (Cb channels of one image)
    # sh_ref:  (1, Ho, H)       row-selection matrix for this bh offset (one-hot rows)
    # swt_ref: (1, W,  Wo)      column-selection matrix (pre-transposed) for this bw offset
    # o_ref:   (1, Cb, Ho, Wo)  output block for channels (bh*bs+bw)*C + [c0, c0+Cb)
    x = x_ref[0]                                 # (Cb, H, W), compute dtype
    s_h = sh_ref[0]                              # (Ho, H)
    s_wt = swt_ref[0]                            # (W, Wo)
    cb = x.shape[0]

    # Broadcast the (tiny) selection matrices over the channel batch so both contractions
    # are the validated batched-matmul form 'bqk,bkd->bqd'.
    sh_b = jnp.broadcast_to(s_h[None, :, :], (cb,) + s_h.shape)     # (Cb, Ho, H)
    swt_b = jnp.broadcast_to(s_wt[None, :, :], (cb,) + s_wt.shape)  # (Cb, W, Wo)

    # Row pick:  y[c, oh, w]  = x[c, oh*bs + bh, w]
    y = jnp.einsum(
        "bqk,bkd->bqd", sh_b, x, preferred_element_type=jnp.float32
    ).astype(x.dtype)  # exact: one-hot selection, values pass through unchanged
    # Col pick:  out[c, oh, ow] = y[c, oh, ow*bs + bw]
    out = jnp.einsum("bqk,bkd->bqd", y, swt_b, preferred_element_type=jnp.float32)

    o_ref[0] = out.astype(o_ref.dtype)


def _choose_cb(C, H, W, Ho, Wo, itemsize, budget_bytes=8 << 20, cap=32):
    """Largest divisor of C (<= cap) whose per-step footprint fits the VMEM budget.

    Budget counts double-buffered input/output blocks plus broadcast selection matrices
    and the f32 intermediates; 8 MiB keeps well inside v7x's 64 MiB VMEM / 32 MiB scoped
    default (v5e/v6e have 2x the physical VMEM, so this is conservative there).
    """
    per_chan = (
        itemsize * (2 * H * W + 2 * Ho * Wo + Ho * H + W * Wo)
        + 4 * (Ho * W + Ho * Wo)
    )
    best = 1
    for d in range(1, min(C, cap) + 1):
        if C % d == 0 and d * per_chan <= budget_bytes:
            best = d
    return best


def space_to_depth(x, bs, *, cb=None):
    N, C, H, W = x.shape
    assert H % bs == 0 and W % bs == 0, "H and W must be divisible by bs"
    Ho, Wo = H // bs, W // bs
    out_dtype = x.dtype

    # Compute dtype: keep bf16 native (exact for 0/1 selection matmuls); everything else
    # goes through f32.
    # TODO(synk): integer inputs with |v| > 2^24 lose exactness on the f32 matmul path.
    compute_dtype = jnp.bfloat16 if x.dtype == jnp.bfloat16 else jnp.float32
    xc = x if x.dtype == compute_dtype else x.astype(compute_dtype)

    itemsize = jnp.dtype(compute_dtype).itemsize
    if cb is None:
        cb = _choose_cb(C, H, W, Ho, Wo, itemsize)
    assert C % cb == 0, "channel batch must divide C"
    nc = C // cb

    # Host-side selection matrices for every intra-block offset (stay VMEM-resident).
    off = jnp.arange(bs)
    # s_h_all[b, oh, h] = 1 iff h == oh*bs + b           -> shape (bs, Ho, H)
    s_h_all = (
        jnp.arange(H)[None, None, :]
        == (jnp.arange(Ho)[None, :, None] * bs + off[:, None, None])
    ).astype(compute_dtype)
    # s_wt_all[b, w, ow] = 1 iff w == ow*bs + b          -> shape (bs, W, Wo)
    s_wt_all = (
        jnp.arange(W)[None, :, None]
        == (jnp.arange(Wo)[None, None, :] * bs + off[:, None, None])
    ).astype(compute_dtype)

    # Grid: bh/bw innermost; the input index_map is invariant over them, so each
    # (n, channel-block) slab is DMA'd from HBM exactly once and reused bs^2 times.
    grid = (N, nc, bs, bs)

    in_specs = [
        pl.BlockSpec((1, cb, H, W), lambda n, c, bh, bw: (n, c, 0, 0)),
        pl.BlockSpec((1, Ho, H), lambda n, c, bh, bw: (bh, 0, 0)),
        pl.BlockSpec((1, W, Wo), lambda n, c, bh, bw: (bw, 0, 0)),
    ]
    # Output channel start = (bh*bs + bw)*C + c*cb  ->  block index (bh*bs + bw)*nc + c.
    out_spec = pl.BlockSpec(
        (1, cb, Ho, Wo),
        lambda n, c, bh, bw: (n, (bh * bs + bw) * nc + c, 0, 0),
    )

    return pl.pallas_call(
        _space_to_depth_kernel,
        out_shape=jax.ShapeDtypeStruct((N, C * bs * bs, Ho, Wo), out_dtype),
        grid_spec=pltpu.PrefetchScalarGridSpec(
            num_scalar_prefetch=0,
            grid=grid,
            in_specs=in_specs,
            out_specs=out_spec,
        ),
        compiler_params=pltpu.CompilerParams(
            # Every (n, c, bh, bw) writes a disjoint output block, no accumulation:
            # all axes are safe to shard across TensorCores (helps v7x, free elsewhere).
            dimension_semantics=("parallel", "parallel", "parallel", "parallel"),
            vmem_limit_bytes=32 * 1024 * 1024,
        ),
    )(xc, s_h_all, s_wt_all)


def space_to_depth_ref(x, bs):
    # Pure-JAX reference mirroring the PyTorch module exactly.
    N, C, H, W = x.shape
    y = x.reshape(N, C, H // bs, bs, W // bs, bs)
    y = jnp.transpose(y, (0, 3, 5, 1, 2, 4))
    return y.reshape(N, C * bs * bs, H // bs, W // bs)


if __name__ == "__main__":
    key = jax.random.PRNGKey(0)
    N, C, H, W, bs = 2, 4, 16, 16, 2
    x = jax.random.normal(key, (N, C, H, W), dtype=jnp.float32)

    out = space_to_depth(x, bs)
    out = jax.block_until_ready(out)

    ref = space_to_depth_ref(x, bs)
    assert out.shape == (N, C * bs * bs, H // bs, W // bs)
    assert jnp.allclose(out, ref), "Pallas output mismatch vs reference"
    print("KERNEL_OK")
</pallas_src>

<mosaic_0001>
module attributes {stable_mosaic.version = 11 : i64} {
  func.func @_space_to_depth_kernel(%arg0: i32, %arg1: i32, %arg2: i32, %arg3: i32, %arg4: memref<1x4x16x16xf32, #tpu.memory_space<vmem>>, %arg5: memref<1x8x16xf32, #tpu.memory_space<vmem>>, %arg6: memref<1x16x8xf32, #tpu.memory_space<vmem>>, %arg7: memref<1x4x8x8xf32, #tpu.memory_space<vmem>>) attributes {dimension_semantics = [#tpu.dimension_semantics<parallel>, #tpu.dimension_semantics<parallel>, #tpu.dimension_semantics<parallel>, #tpu.dimension_semantics<parallel>], iteration_bounds = array<i64: 2, 1, 2, 2>, scalar_prefetch = 0 : i64, scratch_operands = 0 : i64, tpu.core_type = #tpu.core_type<tc>, window_params = [{transform_indices = @transform_0, window_bounds = array<i64: 1, 4, 16, 16>}, {transform_indices = @transform_1, window_bounds = array<i64: 1, 8, 16>}, {transform_indices = @transform_2, window_bounds = array<i64: 1, 16, 8>}, {transform_indices = @transform_3, window_bounds = array<i64: 1, 4, 8, 8>}]} {
    %c0 = arith.constant 0 : index
    %c0_0 = arith.constant 0 : index
    %c0_1 = arith.constant 0 : index
    %c0_2 = arith.constant 0 : index
    %0 = vector.load %arg4[%c0, %c0_0, %c0_1, %c0_2] : memref<1x4x16x16xf32, #tpu.memory_space<vmem>>, vector<1x4x16x16xf32>
    %1 = vector.shape_cast %0 : vector<1x4x16x16xf32> to vector<4x16x16xf32>
    %c0_3 = arith.constant 0 : index
    %c0_4 = arith.constant 0 : index
    %c0_5 = arith.constant 0 : index
    %2 = vector.load %arg5[%c0_3, %c0_4, %c0_5] : memref<1x8x16xf32, #tpu.memory_space<vmem>>, vector<1x8x16xf32>
    %3 = vector.shape_cast %2 : vector<1x8x16xf32> to vector<8x16xf32>
    %c0_6 = arith.constant 0 : index
    %c0_7 = arith.constant 0 : index
    %c0_8 = arith.constant 0 : index
    %4 = vector.load %arg6[%c0_6, %c0_7, %c0_8] : memref<1x16x8xf32, #tpu.memory_space<vmem>>, vector<1x16x8xf32>
    %5 = vector.shape_cast %4 : vector<1x16x8xf32> to vector<16x8xf32>
    %6 = vector.shape_cast %3 : vector<8x16xf32> to vector<1x8x16xf32>
    %7 = vector.shape_cast %6 : vector<1x8x16xf32> to vector<1x8x16xf32>
    %8 = vector.broadcast %7 : vector<1x8x16xf32> to vector<4x8x16xf32>
    %9 = vector.shape_cast %5 : vector<16x8xf32> to vector<1x16x8xf32>
    %10 = vector.shape_cast %9 : vector<1x16x8xf32> to vector<1x16x8xf32>
    %11 = vector.broadcast %10 : vector<1x16x8xf32> to vector<4x16x8xf32>
    "tpu.trace_start"() <{level = 10 : i32, message = "bqk,bkd->bqd"}> : () -> ()
    %cst = arith.constant dense<0.000000e+00> : vector<4x8x16xf32>
    %12 = tpu.matmul %8, %1, %cst {dimension_numbers = #tpu.dot_dimension_numbers<[2], [1], [1], [2], [0, 0, 0, 1, 1, 2], [0], [0]>} : vector<4x8x16xf32>, vector<4x16x16xf32>, vector<4x8x16xf32> -> vector<4x8x16xf32>
    %cst_9 = arith.constant dense<0.000000e+00> : vector<4x8x8xf32>
    %13 = tpu.matmul %12, %11, %cst_9 {dimension_numbers = #tpu.dot_dimension_numbers<[2], [1], [1], [2], [0, 0, 0, 1, 1, 2], [0], [0]>} : vector<4x8x16xf32>, vector<4x16x8xf32>, vector<4x8x8xf32> -> vector<4x8x8xf32>
    "tpu.trace_stop"() : () -> ()
    %c0_10 = arith.constant 0 : index
    %c0_11 = arith.constant 0 : index
    %c0_12 = arith.constant 0 : index
    %c0_13 = arith.constant 0 : index
    %14 = vector.load %arg7[%c0_10, %c0_11, %c0_12, %c0_13] : memref<1x4x8x8xf32, #tpu.memory_space<vmem>>, vector<1x4x8x8xf32>
    %15 = vector.shape_cast %14 : vector<1x4x8x8xf32> to vector<4x8x8xf32>
    %16 = vector.shape_cast %13 : vector<4x8x8xf32> to vector<1x4x8x8xf32>
    tpu.vector_store %arg7[%c0_10, %c0_11, %c0_12, %c0_13], %16 {strides = array<i32>} : memref<1x4x8x8xf32, #tpu.memory_space<vmem>>, vector<1x4x8x8xf32>,
    return
  }
  func.func @transform_0(%arg0: i32, %arg1: i32, %arg2: i32, %arg3: i32) -> (i32, i32, i32, i32) {
    %c0_i32 = arith.constant 0 : i32
    %c0_i32_0 = arith.constant 0 : i32
    %c0_i32_1 = arith.constant 0 : i32
    return %arg0, %arg1, %c0_i32, %c0_i32_0 : i32, i32, i32, i32
  }
  func.func @transform_1(%arg0: i32, %arg1: i32, %arg2: i32, %arg3: i32) -> (i32, i32, i32) {
    %c0_i32 = arith.constant 0 : i32
    %c0_i32_0 = arith.constant 0 : i32
    %c0_i32_1 = arith.constant 0 : i32
    return %arg2, %c0_i32, %c0_i32_0 : i32, i32, i32
  }
  func.func @transform_2(%arg0: i32, %arg1: i32, %arg2: i32, %arg3: i32) -> (i32, i32, i32) {
    %c0_i32 = arith.constant 0 : i32
    %c0_i32_0 = arith.constant 0 : i32
    %c0_i32_1 = arith.constant 0 : i32
    return %arg3, %c0_i32, %c0_i32_0 : i32, i32, i32
  }
  func.func @transform_3(%arg0: i32, %arg1: i32, %arg2: i32, %arg3: i32) -> (i32, i32, i32, i32) {
    %c2_i32 = arith.constant 2 : i32
    %0 = arith.muli %arg2, %c2_i32 : i32
    %1 = arith.addi %0, %arg3 : i32
    %c1_i32 = arith.constant 1 : i32
    %2 = arith.muli %1, %c1_i32 : i32
    %3 = arith.addi %2, %arg1 : i32
    %c0_i32 = arith.constant 0 : i32
    %c0_i32_0 = arith.constant 0 : i32
    %c0_i32_1 = arith.constant 0 : i32
    return %arg0, %3, %c0_i32, %c0_i32_0 : i32, i32, i32, i32
  }
}

</mosaic_0001>

<llo_original>
// kernel: tpu_custom_call.1
$region0: #{tpu_custom_call.1}
  #allocation0 [shape = 'u32[]', space=smem, size = 0x4, offset = 0x4, fixed_abs, tag = 'smem constant byte address 0x4 - core index']
  #allocation1 [shape = 'u32[144,128]{1,0:T(1,128)}', space=vmem, size = 0x12000, scoped, tag = 'internal scratch']
  %s0 = inlined_call_operand.hbm [shape: f32[2,4,16,16], index: 0, kind: input, shape index: {}]
  %s1 = inlined_call_operand.vmem [shape: f32[2,8,16], index: 1, kind: input, shape index: {}]
  %s2 = inlined_call_operand.vmem [shape: f32[2,16,8], index: 2, kind: input, shape index: {}]
  %s3 = inlined_call_operand.vmem [shape: f32[2,16,8,8], index: 3, kind: output, shape index: {}]
  %s4 = sld [smem:[#allocation0]]
  $region49: #{tpu_custom_call.1} parent=0
    _
  %s6 = ssub.s32 1, %s4
  %s7 = scalar_select 0, %s6, %s4
  $region1: #{tpu_custom_call.1} parent=0
    #allocation2 [shape = 'u8[65536]{0}', space=vmem, size = 0x10000, scoped, tag = 'input window, operand 0']
    #allocation3 [shape = 's32[2]{0}', space=sflag, size = 0x8, scoped, tag = 'scoped memory for tpu_custom_call.1']
    %8 = vsyncpa [#allocation3], 0
    %s9 = scalar_lea.sflag [#allocation3], 1
    %10 = vsyncpa %s9, 0
    loop: start=0, step=1, limit=10
    $region2: #{tpu_custom_call.1} parent=1 // loop_pre_header
      _
    $region3: #{tpu_custom_call.1} parent=1 // loop_header
      %s12 = sphi 0, %s16
      %p13 = scmp.ge.s32.totalorder %s12, 10
      %s19 = sphi 0, %s45
      %s20 = sphi 0, %s41
      %s21 = sphi 0, %s37
      %s22 = sphi 0, %s33
      %s23 = sphi 0, %s19
      %s24 = sphi 0, %s20
      %s25 = sphi 0, %s21
      %s26 = sphi 0, %s22
      %s27 = sphi 0, %s23
      %s28 = sphi 0, %s24
      %s29 = sphi 0, %s25
      %s30 = sphi 0, %s26
      %s50 = sphi 0, %s52
      %s53 = sphi 0, %s50
      %s54 = sphi 0, %s53
      %s70 = sphi 0, %s54
      %s76 = sphi 0, %s78
      %s79 = sphi 0, %s76
      %s80 = sphi 0, %s79
      %s96 = sphi 0, %s80
      %s102 = sphi 0, %s104
      %s105 = sphi 0, %s102
      %s106 = sphi 0, %s105
      %s122 = sphi 0, %s106
      %s136 = sphi 0, %s138
      %s139 = sphi 0, %s136
      %s140 = sphi 0, %s139
      %s156 = sphi 0, %s140
    $region4: #{tpu_custom_call.1} parent=1 // loop_header_branch
      %15 = sbr.rel (%p13) target = $region8
    $region5: #{tpu_custom_call.1} parent=1 // loop_body
      %s17 = ssub.s32 %s12, 1
      %s18 = ssub.s32 %s12, 2
      %s31 = sadd.s32 1, %s22
      %p32 = scmp.ge.s32.totalorder %s31, 2
      %s33 = scalar_select %p32, 0, %s31
      %s34 = sadd.s32 1, %s21
      %s35 = scalar_select %p32, %s34, %s21
      %p36 = scmp.ge.s32.totalorder %s35, 2
      %s37 = scalar_select %p36, 0, %s35
      %s38 = sadd.s32 1, %s20
      %s39 = scalar_select %p36, %s38, %s20
      %p40 = scmp.ge.s32.totalorder %s39, 1
      %s41 = scalar_select %p40, 0, %s39
      %s42 = sadd.s32 1, %s19
      %s43 = scalar_select %p40, %s42, %s19
      %p44 = scmp.ge.s32.totalorder %s43, 2
      %s45 = scalar_select %p44, 0, %s43
      %s46 = ssub.s32 %s19, %s45
      %s47 = ssub.s32 %s20, %s41
      %s48 = sor.u32 %s46, %s47
      %p49 = scmp.eq.s32.totalorder %s48, 0
      %s51 = sadd.s32 %s50, 1
      %s52 = scalar_select %p49, %s50, %s51
      %p55 = pneg %p49
      %p56 = scmp.eq.s32.totalorder %s12, 7
      %p57 = por %p55, %p56
      %p58 = scmp.ne.s32.totalorder %s50, %s53
      %p59 = scmp.eq.s32.totalorder %s12, 0
      %p60 = por %p58, %p59
      %p61 = scmp.ne.s32.totalorder %s50, %s53
      %p62 = scmp.eq.s32.totalorder %s17, 7
      %p63 = por %p61, %p62
      %p64 = scmp.ne.s32.totalorder %s53, %s54
      %p65 = scmp.eq.s32.totalorder %s17, 0
      %p66 = por %p64, %p65
      %p67 = scmp.ne.s32.totalorder %s53, %s54
      %p68 = scmp.eq.s32.totalorder %s18, 7
      %p69 = por %p67, %p68
      %p71 = scmp.ne.s32.totalorder %s54, %s70
      %p72 = scmp.eq.s32.totalorder %s18, 0
      %p73 = por %p71, %p72
      %s74 = ssub.s32 %s21, %s37
      %p75 = scmp.eq.s32.totalorder %s74, 0
      %s77 = sadd.s32 %s76, 1
      %s78 = scalar_select %p75, %s76, %s77
      %p81 = pneg %p75
      %p82 = scmp.eq.s32.totalorder %s12, 7
      %p83 = por %p81, %p82
      %p84 = scmp.ne.s32.totalorder %s76, %s79
      %p85 = scmp.eq.s32.totalorder %s12, 0
      %p86 = por %p84, %p85
      %p87 = scmp.ne.s32.totalorder %s76, %s79
      %p88 = scmp.eq.s32.totalorder %s17, 7
      %p89 = por %p87, %p88
      %p90 = scmp.ne.s32.totalorder %s79, %s80
      %p91 = scmp.eq.s32.totalorder %s17, 0
      %p92 = por %p90, %p91
      %p93 = scmp.ne.s32.totalorder %s79, %s80
      %p94 = scmp.eq.s32.totalorder %s18, 7
      %p95 = por %p93, %p94
      %p97 = scmp.ne.s32.totalorder %s80, %s96
      %p98 = scmp.eq.s32.totalorder %s18, 0
      %p99 = por %p97, %p98
      %s100 = ssub.s32 %s22, %s33
      %p101 = scmp.eq.s32.totalorder %s100, 0
      %s103 = sadd.s32 %s102, 1
      %s104 = scalar_select %p101, %s102, %s103
      %p107 = pneg %p101
      %p108 = scmp.eq.s32.totalorder %s12, 7
      %p109 = por %p107, %p108
      %p110 = scmp.ne.s32.totalorder %s102, %s105
      %p111 = scmp.eq.s32.totalorder %s12, 0
      %p112 = por %p110, %p111
      %p113 = scmp.ne.s32.totalorder %s102, %s105
      %p114 = scmp.eq.s32.totalorder %s17, 7
      %p115 = por %p113, %p114
      %p116 = scmp.ne.s32.totalorder %s105, %s106
      %p117 = scmp.eq.s32.totalorder %s17, 0
      %p118 = por %p116, %p117
      %p119 = scmp.ne.s32.totalorder %s105, %s106
      %p120 = scmp.eq.s32.totalorder %s18, 7
      %p121 = por %p119, %p120
      %p123 = scmp.ne.s32.totalorder %s106, %s122
      %p124 = scmp.eq.s32.totalorder %s18, 0
      %p125 = por %p123, %p124
      %s126 = smul.u32 %s21, 2
      %s127 = sadd.s32 %s126, %s22
      %s128 = sadd.s32 %s127, %s20
      %s129 = smul.u32 %s37, 2
      %s130 = sadd.s32 %s129, %s33
      %s131 = sadd.s32 %s130, %s41
      %s132 = ssub.s32 %s19, %s45
      %s133 = ssub.s32 %s128, %s131
      %s134 = sor.u32 %s132, %s133
      %p135 = scmp.eq.s32.totalorder %s134, 0
      %s137 = sadd.s32 %s136, 1
      %s138 = scalar_select %p135, %s136, %s137
      %p141 = pneg %p135
      %p142 = scmp.eq.s32.totalorder %s12, 7
      %p143 = por %p141, %p142
      %p144 = scmp.ne.s32.totalorder %s136, %s139
      %p145 = scmp.eq.s32.totalorder %s12, 0
      %p146 = por %p144, %p145
      %p147 = scmp.ne.s32.totalorder %s136, %s139
      %p148 = scmp.eq.s32.totalorder %s17, 7
      %p149 = por %p147, %p148
      %p150 = scmp.ne.s32.totalorder %s139, %s140
      %p151 = scmp.eq.s32.totalorder %s17, 0
      %p152 = por %p150, %p151
      %p153 = scmp.ne.s32.totalorder %s139, %s140
      %p154 = scmp.eq.s32.totalorder %s18, 7
      %p155 = por %p153, %p154
      %p157 = scmp.ne.s32.totalorder %s140, %s156
      %p158 = scmp.eq.s32.totalorder %s18, 0
      %p159 = por %p157, %p158
      %p160 = scmp.le.s32.totalorder 1, %s12
      %p161 = scmp.lt.s32.totalorder %s12, 9
      %p162 = pnand %p160, %p161
      %p163 = pneg %p162
      // Predicated region
      $region9: #{tpu_custom_call.1} parent=5 // pred_check
        _
      $region10: #{tpu_custom_call.1} parent=5 // pred_check_branch
        %165 = sbr.rel (%p162) target = $region12
      $region11: #{tpu_custom_call.1} parent=5 // pred_region
        %s166 = ssub.s32 %s12, 1
      $region12: #{tpu_custom_call.1} parent=5 // pred_fallthru
        _
      %p167 = scmp.lt.s32.totalorder %s12, 8
      // Predicated region
      $region13: #{tpu_custom_call.1} parent=5 // pred_check
        %p168 = pneg %p167
      $region14: #{tpu_custom_call.1} parent=5 // pred_check_branch
        %170 = sbr.rel (%p168) target = $region16
      $region15: #{tpu_custom_call.1} parent=5 // pred_region
        // Predicated region
        $region17: #{tpu_custom_call.1} parent=15 // pred_check
          %p171 = pneg %p60
        $region18: #{tpu_custom_call.1} parent=15 // pred_check_branch
          %173 = sbr.rel (%p171) target = $region20
        $region19: #{tpu_custom_call.1} parent=15 // pred_region
          %s174 = sand.u32 %s50, 1
          %s175 = scalar_lea.sflag [#allocation3], %s174
          %s176 = sand.u32 %s50, 1
          %s177 = smul.addr %s176, 64
          %s178 = scalar_lea.vmem [#allocation2], %s177
          %s179 = smul.u32 4, %s20
          %s181 = ssub.s32 1024, 1024
          %182 = vsyncadd %s175, %s181
          %s183 = smul.addr %s179, 2
          %s184 = smul.addr %s19, 8
          %s185 = sadd.s32 %s183, %s184
          %s186 = smul.addr %s185, 128
          %s187 = scalar_lea.hbm %s0, %s186
          %s188 = sshll.u32 %s178, 4
          %s189 = int_to_ptr.vmem [resolvable:$true] %s188
          %194 = dma.hbm_to_vmem [thread:$0]  %s187, 1024, %s189, %s175, 128, 128, 8
        $region20: #{tpu_custom_call.1} parent=15 // pred_fallthru
          _
        // Predicated region
        $region21: #{tpu_custom_call.1} parent=15 // pred_check
          %p195 = pneg %p86
        $region22: #{tpu_custom_call.1} parent=15 // pred_check_branch
          %197 = sbr.rel (%p195) target = $region24
        $region23: #{tpu_custom_call.1} parent=15 // pred_region
          %p198 = scmp.lt.s32.totalorder %s21, 1
          %s199 = scalar_select %p198, %s21, 1
          %s200 = smul.addr %s199, 8
          %s201 = scalar_lea.vmem %s1, %s200
        $region24: #{tpu_custom_call.1} parent=15 // pred_fallthru
          _
        // Predicated region
        $region25: #{tpu_custom_call.1} parent=15 // pred_check
          %p202 = pneg %p112
        $region26: #{tpu_custom_call.1} parent=15 // pred_check_branch
          %204 = sbr.rel (%p202) target = $region28
        $region27: #{tpu_custom_call.1} parent=15 // pred_region
          %p205 = scmp.lt.s32.totalorder %s22, 1
          %s206 = scalar_select %p205, %s22, 1
          %s207 = smul.addr %s206, 2
          %s208 = smul.addr %s207, 8
          %s209 = scalar_lea.vmem %s2, %s208
        $region28: #{tpu_custom_call.1} parent=15 // pred_fallthru
          _
      $region16: #{tpu_custom_call.1} parent=5 // pred_fallthru
        _
      %p210 = scmp.le.s32.totalorder 1, %s12
      %p211 = scmp.lt.s32.totalorder %s12, 9
      %p212 = pnand %p210, %p211
      %p213 = pneg %p212
      // Predicated region
      $region29: #{tpu_custom_call.1} parent=5 // pred_check
        _
      $region30: #{tpu_custom_call.1} parent=5 // pred_check_branch
        %215 = sbr.rel (%p212) target = $region32
      $region31: #{tpu_custom_call.1} parent=5 // pred_region
        %s216 = ssub.s32 %s12, 1
        %s217 = sand.u32 %s53, 1
        %s218 = scalar_lea.sflag [#allocation3], %s217
        %s219 = sand.u32 %s53, 1
        %s220 = smul.addr %s219, 64
        %s221 = scalar_lea.vmem [#allocation2], %s220
        // Predicated region
        $region33: #{tpu_custom_call.1} parent=31 // pred_check
          %p222 = pneg %p66
        $region34: #{tpu_custom_call.1} parent=31 // pred_check_branch
          %224 = sbr.rel (%p222) target = $region36
        $region35: #{tpu_custom_call.1} parent=31 // pred_region
          %225 = dma.done %s218, 1024
        $region36: #{tpu_custom_call.1} parent=31 // pred_fallthru
          _
        %s226 = sand.u32 %s53, 1
        %s227 = scalar_lea.sflag [#allocation3], %s226
        %s228 = sand.u32 %s53, 1
        %s229 = smul.addr %s228, 64
        %s230 = scalar_lea.vmem [#allocation2], %s229
        %p231 = pneg %p66
        %p232 = pneg %p63
        %p233 = scmp.lt.s32.totalorder %s25, 1
        %s234 = scalar_select %p233, %s25, 1
        %s235 = smul.addr %s234, 8
        %s236 = scalar_lea.vmem %s1, %s235
        %p237 = pneg %p92
        %p238 = pneg %p89
        %p239 = scmp.lt.s32.totalorder %s26, 1
        %s240 = scalar_select %p239, %s26, 1
        %s241 = smul.addr %s240, 2
        %s242 = smul.addr %s241, 8
        %s243 = scalar_lea.vmem %s2, %s242
        %p244 = pneg %p118
        %p245 = pneg %p115
        %p246 = pneg %p152
        %p247 = pneg %p149
        %s248 = smul.u32 %s25, 2
        %s249 = sadd.s32 %s248, %s26
        %s250 = sadd.s32 %s249, %s24
        %s251 = smul.u32 4, %s250
        %p252 = scmp.lt.s32.totalorder %s23, 1
        %s253 = scalar_select %p252, %s23, 1
        %p254 = scmp.lt.s32.totalorder %s251, 15
        %s255 = scalar_select %p254, %s251, 15
        %s256 = smul.addr %s253, 16
        %s257 = sadd.s32 %s255, %s256
        %s258 = smul.addr %s257, 8
        %s259 = scalar_lea.vmem %s3, %s258
        %s260 = smul.u32 4, %s24
        %p261 = scmp.lt.s32.totalorder %s25, 1
        %s262 = scalar_select %p261, %s25, 1
        %s263 = smul.addr %s262, 8
        %s264 = scalar_lea.vmem %s1, %s263
        %p265 = scmp.lt.s32.totalorder %s26, 1
        %s266 = scalar_select %p265, %s26, 1
        %s267 = smul.addr %s266, 2
        %s268 = smul.addr %s267, 8
        %s269 = scalar_lea.vmem %s2, %s268
        %s270 = smul.u32 %s25, 2
        %s271 = sadd.s32 %s270, %s26
        %s272 = sadd.s32 %s271, %s24
        %s273 = smul.u32 4, %s272
        %p274 = scmp.lt.s32.totalorder %s23, 1
        %s275 = scalar_select %p274, %s23, 1
        %p276 = scmp.lt.s32.totalorder %s273, 15
        %s277 = scalar_select %p276, %s273, 15
        %s278 = smul.addr %s275, 16
        %s279 = sadd.s32 %s277, %s278
        %s280 = smul.addr %s279, 8
        %s281 = scalar_lea.vmem %s3, %s280
        %s282 = smul.u32 %s25, 2
        %s283 = sadd.s32 %s282, %s26
        %s284 = sadd.s32 %s283, %s24
        %s285 = smul.u32 4, %s284
        %v286 = vld [vmem:[%s221] sm:$0xff]
        %v287 = vld [vmem:[%s221 + $0x8] sm:$0xff]
        %v288 = vld [vmem:[%s221 + $0x10] sm:$0xff]
        %v289 = vld [vmem:[%s221 + $0x18] sm:$0xff]
        %v290 = vld [vmem:[%s221 + $0x20] sm:$0xff]
        %v291 = vld [vmem:[%s221 + $0x28] sm:$0xff]
        %v292 = vld [vmem:[%s221 + $0x30] sm:$0xff]
        %v293 = vld [vmem:[%s221 + $0x38] sm:$0xff]
        %v294 = vld [vmem:[%s264] sm:$0xff]
        %v295 = vld [vmem:[%s269] sm:$0xff]
        %v296 = vld [vmem:[%s269 + $0x8] sm:$0xff]
        %vm297 = vcmask 130048
        %v299 = vsel %vm297, %v294, 0
        %301 = vmatprep.subr.mxu0 0.0
        %302 = vmatpush1.msra.mxu0 %v286
        %303 = vmatprep.subr.mxu0 0.0
        %304 = vmatpush1.msra.mxu0 %v287
        %305 = vmatprep.subr.mxu0 0.0
        %306 = vmatpush1.msra.mxu0 0.0
        %307 = vmatprep.subr.mxu0 0.0
        %308 = vmatpush1.msra.mxu0 0.0
        %309 = vmatprep.subr.mxu0 0.0
        %310 = vmatpush1.msra.mxu0 0.0
        %311 = vmatprep.subr.mxu0 0.0
        %312 = vmatpush1.msra.mxu0 0.0
        %313 = vmatprep.subr.mxu0 0.0
        %314 = vmatpush1.msra.mxu0 0.0
        %315 = vmatprep.subr.mxu0 0.0
        %316 = vmatpush1.msra.mxu0 0.0
        %317 = vmatprep.subr.mxu0 0.0
        %318 = vmatpush1.msra.mxu0 0.0
        %319 = vmatprep.subr.mxu0 0.0
        %320 = vmatpush1.msra.mxu0 0.0
        %321 = vmatprep.subr.mxu0 0.0
        %322 = vmatpush1.msra.mxu0 0.0
        %323 = vmatprep.subr.mxu0 0.0
        %324 = vmatpush1.msra.mxu0 0.0
        %325 = vmatprep.subr.mxu0 0.0
        %326 = vmatpush1.msra.mxu0 0.0
        %327 = vmatprep.subr.mxu0 0.0
        %328 = vmatpush1.msra.mxu0 0.0
        %329 = vmatprep.subr.mxu0 0.0
        %330 = vmatpush1.msra.mxu0 0.0
        %331 = vmatprep.subr.mxu0 0.0
        %332 = vmatpush1.msra.mxu0 0.0
        %333 = vmatprep.subr.mxu0 0.0
        %334 = vmatpush1.msra.mxu0 0.0
        %335 = vmatprep.subr.mxu0 0.0
        %336 = vmatpush1.msra.mxu0 0.0
        %337 = vmatprep.subr.mxu0 0.0
        %338 = vmatpush1.msra.mxu0 0.0
        %339 = vmatprep.subr.mxu0 0.0
        %340 = vmatpush1.msra.mxu0 0.0
        %341 = vmatprep.subr.mxu0 0.0
        %342 = vmatpush1.msra.mxu0 0.0
        %343 = vmatprep.subr.mxu0 0.0
        %344 = vmatpush1.msra.mxu0 0.0
        %345 = vmatprep.subr.mxu0 0.0
        %346 = vmatpush1.msra.mxu0 0.0
        %347 = vmatprep.subr.mxu0 0.0
        %348 = vmatpush1.msra.mxu0 0.0
        %349 = vmatprep.subr.mxu0 0.0
        %350 = vmatpush1.msra.mxu0 0.0
        %351 = vmatprep.subr.mxu0 0.0
        %352 = vmatpush1.msra.mxu0 0.0
        %353 = vmatprep.subr.mxu0 0.0
        %354 = vmatpush1.msra.mxu0 0.0
        %355 = vmatprep.subr.mxu0 0.0
        %356 = vmatpush1.msra.mxu0 0.0
        %357 = vmatprep.subr.mxu0 0.0
        %358 = vmatpush1.msra.mxu0 0.0
        %359 = vmatprep.subr.mxu0 0.0
        %360 = vmatpush1.msra.mxu0 0.0
        %361 = vmatprep.subr.mxu0 0.0
        %362 = vmatpush1.msra.mxu0 0.0
        %363 = vmatprep.subr.mxu0 0.0
        %364 = vmatpush1.msra.mxu0 0.0
        %365 = vmatprep.mubr.f32.mxu0 0.0
        %366 = vmatmul.mubr.f32.gmra.mrb[0].mxu0 %v299
        %v367 = vpop.f32.mrb[0].mxu0
        %v368 = vadd.f32 0.0, %v367
        %v369 = vpop.f32.mrb[0].mxu0
        %370 = vdwg.mxu0
        %371 = vmatprep.subr.mxu0 0.0
        %372 = vmatpush1.msra.mxu0 %v288
        %373 = vmatprep.subr.mxu0 0.0
        %374 = vmatpush1.msra.mxu0 %v289
        %375 = vmatprep.subr.mxu0 0.0
        %376 = vmatpush1.msra.mxu0 0.0
        %377 = vmatprep.subr.mxu0 0.0
        %378 = vmatpush1.msra.mxu0 0.0
        %379 = vmatprep.subr.mxu0 0.0
        %380 = vmatpush1.msra.mxu0 0.0
        %381 = vmatprep.subr.mxu0 0.0
        %382 = vmatpush1.msra.mxu0 0.0
        %383 = vmatprep.subr.mxu0 0.0
        %384 = vmatpush1.msra.mxu0 0.0
        %385 = vmatprep.subr.mxu0 0.0
        %386 = vmatpush1.msra.mxu0 0.0
        %387 = vmatprep.subr.mxu0 0.0
        %388 = vmatpush1.msra.mxu0 0.0
        %389 = vmatprep.subr.mxu0 0.0
        %390 = vmatpush1.msra.mxu0 0.0
        %391 = vmatprep.subr.mxu0 0.0
        %392 = vmatpush1.msra.mxu0 0.0
        %393 = vmatprep.subr.mxu0 0.0
        %394 = vmatpush1.msra.mxu0 0.0
        %395 = vmatprep.subr.mxu0 0.0
        %396 = vmatpush1.msra.mxu0 0.0
        %397 = vmatprep.subr.mxu0 0.0
        %398 = vmatpush1.msra.mxu0 0.0
        %399 = vmatprep.subr.mxu0 0.0
        %400 = vmatpush1.msra.mxu0 0.0
        %401 = vmatprep.subr.mxu0 0.0
        %402 = vmatpush1.msra.mxu0 0.0
        %403 = vmatprep.subr.mxu0 0.0
        %404 = vmatpush1.msra.mxu0 0.0
        %405 = vmatprep.subr.mxu0 0.0
        %406 = vmatpush1.msra.mxu0 0.0
        %407 = vmatprep.subr.mxu0 0.0
        %408 = vmatpush1.msra.mxu0 0.0
        %409 = vmatprep.subr.mxu0 0.0
        %410 = vmatpush1.msra.mxu0 0.0
        %411 = vmatprep.subr.mxu0 0.0
        %412 = vmatpush1.msra.mxu0 0.0
        %413 = vmatprep.subr.mxu0 0.0
        %414 = vmatpush1.msra.mxu0 0.0
        %415 = vmatprep.subr.mxu0 0.0
        %416 = vmatpush1.msra.mxu0 0.0
        %417 = vmatprep.subr.mxu0 0.0
        %418 = vmatpush1.msra.mxu0 0.0
        %419 = vmatprep.subr.mxu0 0.0
        %420 = vmatpush1.msra.mxu0 0.0
        %421 = vmatprep.subr.mxu0 0.0
        %422 = vmatpush1.msra.mxu0 0.0
        %423 = vmatprep.subr.mxu0 0.0
        %424 = vmatpush1.msra.mxu0 0.0
        %425 = vmatprep.subr.mxu0 0.0
        %426 = vmatpush1.msra.mxu0 0.0
        %427 = vmatprep.subr.mxu0 0.0
        %428 = vmatpush1.msra.mxu0 0.0
        %429 = vmatprep.subr.mxu0 0.0
        %430 = vmatpush1.msra.mxu0 0.0
        %431 = vmatprep.subr.mxu0 0.0
        %432 = vmatpush1.msra.mxu0 0.0
        %433 = vmatprep.subr.mxu0 0.0
        %434 = vmatpush1.msra.mxu0 0.0
        %435 = vmatprep.mubr.f32.mxu0 0.0
        %436 = vmatmul.mubr.f32.gmra.mrb[0].mxu0 %v299
        %v437 = vpop.f32.mrb[0].mxu0
        %v438 = vadd.f32 0.0, %v437
        %v439 = vpop.f32.mrb[0].mxu0
        %440 = vdwg.mxu0
        %441 = vmatprep.subr.mxu0 0.0
        %442 = vmatpush1.msra.mxu0 %v290
        %443 = vmatprep.subr.mxu0 0.0
        %444 = vmatpush1.msra.mxu0 %v291
        %445 = vmatprep.subr.mxu0 0.0
        %446 = vmatpush1.msra.mxu0 0.0
        %447 = vmatprep.subr.mxu0 0.0
        %448 = vmatpush1.msra.mxu0 0.0
        %449 = vmatprep.subr.mxu0 0.0
        %450 = vmatpush1.msra.mxu0 0.0
        %451 = vmatprep.subr.mxu0 0.0
        %452 = vmatpush1.msra.mxu0 0.0
        %453 = vmatprep.subr.mxu0 0.0
        %454 = vmatpush1.msra.mxu0 0.0
        %455 = vmatprep.subr.mxu0 0.0
        %456 = vmatpush1.msra.mxu0 0.0
        %457 = vmatprep.subr.mxu0 0.0
        %458 = vmatpush1.msra.mxu0 0.0
        %459 = vmatprep.subr.mxu0 0.0
        %460 = vmatpush1.msra.mxu0 0.0
        %461 = vmatprep.subr.mxu0 0.0
        %462 = vmatpush1.msra.mxu0 0.0
        %463 = vmatprep.subr.mxu0 0.0
        %464 = vmatpush1.msra.mxu0 0.0
        %465 = vmatprep.subr.mxu0 0.0
        %466 = vmatpush1.msra.mxu0 0.0
        %467 = vmatprep.subr.mxu0 0.0
        %468 = vmatpush1.msra.mxu0 0.0
        %469 = vmatprep.subr.mxu0 0.0
        %470 = vmatpush1.msra.mxu0 0.0
        %471 = vmatprep.subr.mxu0 0.0
        %472 = vmatpush1.msra.mxu0 0.0
        %473 = vmatprep.subr.mxu0 0.0
        %474 = vmatpush1.msra.mxu0 0.0
        %475 = vmatprep.subr.mxu0 0.0
        %476 = vmatpush1.msra.mxu0 0.0
        %477 = vmatprep.subr.mxu0 0.0
        %478 = vmatpush1.msra.mxu0 0.0
        %479 = vmatprep.subr.mxu0 0.0
        %480 = vmatpush1.msra.mxu0 0.0
        %481 = vmatprep.subr.mxu0 0.0
        %482 = vmatpush1.msra.mxu0 0.0
        %483 = vmatprep.subr.mxu0 0.0
        %484 = vmatpush1.msra.mxu0 0.0
        %485 = vmatprep.subr.mxu0 0.0
        %486 = vmatpush1.msra.mxu0 0.0
        %487 = vmatprep.subr.mxu0 0.0
        %488 = vmatpush1.msra.mxu0 0.0
        %489 = vmatprep.subr.mxu0 0.0
        %490 = vmatpush1.msra.mxu0 0.0
        %491 = vmatprep.subr.mxu0 0.0
        %492 = vmatpush1.msra.mxu0 0.0
        %493 = vmatprep.subr.mxu0 0.0
        %494 = vmatpush1.msra.mxu0 0.0
        %495 = vmatprep.subr.mxu0 0.0
        %496 = vmatpush1.msra.mxu0 0.0
        %497 = vmatprep.subr.mxu0 0.0
        %498 = vmatpush1.msra.mxu0 0.0
        %499 = vmatprep.subr.mxu0 0.0
        %500 = vmatpush1.msra.mxu0 0.0
        %501 = vmatprep.subr.mxu0 0.0
        %502 = vmatpush1.msra.mxu0 0.0
        %503 = vmatprep.subr.mxu0 0.0
        %504 = vmatpush1.msra.mxu0 0.0
        %505 = vmatprep.mubr.f32.mxu0 0.0
        %506 = vmatmul.mubr.f32.gmra.mrb[0].mxu0 %v299
        %v507 = vpop.f32.mrb[0].mxu0
        %v508 = vadd.f32 0.0, %v507
        %v509 = vpop.f32.mrb[0].mxu0
        %510 = vdwg.mxu0
        %511 = vmatprep.subr.mxu0 0.0
        %512 = vmatpush1.msra.mxu0 %v292
        %513 = vmatprep.subr.mxu0 0.0
        %514 = vmatpush1.msra.mxu0 %v293
        %515 = vmatprep.subr.mxu0 0.0
        %516 = vmatpush1.msra.mxu0 0.0
        %517 = vmatprep.subr.mxu0 0.0
        %518 = vmatpush1.msra.mxu0 0.0
        %519 = vmatprep.subr.mxu0 0.0
        %520 = vmatpush1.msra.mxu0 0.0
        %521 = vmatprep.subr.mxu0 0.0
        %522 = vmatpush1.msra.mxu0 0.0
        %523 = vmatprep.subr.mxu0 0.0
        %524 = vmatpush1.msra.mxu0 0.0
        %525 = vmatprep.subr.mxu0 0.0
        %526 = vmatpush1.msra.mxu0 0.0
        %527 = vmatprep.subr.mxu0 0.0
        %528 = vmatpush1.msra.mxu0 0.0
        %529 = vmatprep.subr.mxu0 0.0
        %530 = vmatpush1.msra.mxu0 0.0
        %531 = vmatprep.subr.mxu0 0.0
        %532 = vmatpush1.msra.mxu0 0.0
        %533 = vmatprep.subr.mxu0 0.0
        %534 = vmatpush1.msra.mxu0 0.0
        %535 = vmatprep.subr.mxu0 0.0
        %536 = vmatpush1.msra.mxu0 0.0
        %537 = vmatprep.subr.mxu0 0.0
        %538 = vmatpush1.msra.mxu0 0.0
        %539 = vmatprep.subr.mxu0 0.0
        %540 = vmatpush1.msra.mxu0 0.0
        %541 = vmatprep.subr.mxu0 0.0
        %542 = vmatpush1.msra.mxu0 0.0
        %543 = vmatprep.subr.mxu0 0.0
        %544 = vmatpush1.msra.mxu0 0.0
        %545 = vmatprep.subr.mxu0 0.0
        %546 = vmatpush1.msra.mxu0 0.0
        %547 = vmatprep.subr.mxu0 0.0
        %548 = vmatpush1.msra.mxu0 0.0
        %549 = vmatprep.subr.mxu0 0.0
        %550 = vmatpush1.msra.mxu0 0.0
        %551 = vmatprep.subr.mxu0 0.0
        %552 = vmatpush1.msra.mxu0 0.0
        %553 = vmatprep.subr.mxu0 0.0
        %554 = vmatpush1.msra.mxu0 0.0
        %555 = vmatprep.subr.mxu0 0.0
        %556 = vmatpush1.msra.mxu0 0.0
        %557 = vmatprep.subr.mxu0 0.0
        %558 = vmatpush1.msra.mxu0 0.0
        %559 = vmatprep.subr.mxu0 0.0
        %560 = vmatpush1.msra.mxu0 0.0
        %561 = vmatprep.subr.mxu0 0.0
        %562 = vmatpush1.msra.mxu0 0.0
        %563 = vmatprep.subr.mxu0 0.0
        %564 = vmatpush1.msra.mxu0 0.0
        %565 = vmatprep.subr.mxu0 0.0
        %566 = vmatpush1.msra.mxu0 0.0
        %567 = vmatprep.subr.mxu0 0.0
        %568 = vmatpush1.msra.mxu0 0.0
        %569 = vmatprep.subr.mxu0 0.0
        %570 = vmatpush1.msra.mxu0 0.0
        %571 = vmatprep.subr.mxu0 0.0
        %572 = vmatpush1.msra.mxu0 0.0
        %573 = vmatprep.subr.mxu0 0.0
        %574 = vmatpush1.msra.mxu0 0.0
        %575 = vmatprep.mubr.f32.mxu0 0.0
        %576 = vmatmul.mubr.f32.gmra.mrb[0].mxu0 %v299
        %v577 = vpop.f32.mrb[0].mxu0
        %v578 = vadd.f32 0.0, %v577
        %v579 = vpop.f32.mrb[0].mxu0
        %580 = vdwg.mxu0
        %v582 = vsel %vm297, %v368, 0
        %584 = vmatprep.subr.mxu0 0.0
        %585 = vmatpush1.msra.mxu0 %v295
        %586 = vmatprep.subr.mxu0 0.0
        %587 = vmatpush1.msra.mxu0 %v296
        %588 = vmatprep.subr.mxu0 0.0
        %589 = vmatpush1.msra.mxu0 0.0
        %590 = vmatprep.subr.mxu0 0.0
        %591 = vmatpush1.msra.mxu0 0.0
        %592 = vmatprep.subr.mxu0 0.0
        %593 = vmatpush1.msra.mxu0 0.0
        %594 = vmatprep.subr.mxu0 0.0
        %595 = vmatpush1.msra.mxu0 0.0
        %596 = vmatprep.subr.mxu0 0.0
        %597 = vmatpush1.msra.mxu0 0.0
        %598 = vmatprep.subr.mxu0 0.0
        %599 = vmatpush1.msra.mxu0 0.0
        %600 = vmatprep.subr.mxu0 0.0
        %601 = vmatpush1.msra.mxu0 0.0
        %602 = vmatprep.subr.mxu0 0.0
        %603 = vmatpush1.msra.mxu0 0.0
        %604 = vmatprep.subr.mxu0 0.0
        %605 = vmatpush1.msra.mxu0 0.0
        %606 = vmatprep.subr.mxu0 0.0
        %607 = vmatpush1.msra.mxu0 0.0
        %608 = vmatprep.subr.mxu0 0.0
        %609 = vmatpush1.msra.mxu0 0.0
        %610 = vmatprep.subr.mxu0 0.0
        %611 = vmatpush1.msra.mxu0 0.0
        %612 = vmatprep.subr.mxu0 0.0
        %613 = vmatpush1.msra.mxu0 0.0
        %614 = vmatprep.subr.mxu0 0.0
        %615 = vmatpush1.msra.mxu0 0.0
        %616 = vmatprep.subr.mxu0 0.0
        %617 = vmatpush1.msra.mxu0 0.0
        %618 = vmatprep.subr.mxu0 0.0
        %619 = vmatpush1.msra.mxu0 0.0
        %620 = vmatprep.subr.mxu0 0.0
        %621 = vmatpush1.msra.mxu0 0.0
        %622 = vmatprep.subr.mxu0 0.0
        %623 = vmatpush1.msra.mxu0 0.0
        %624 = vmatprep.subr.mxu0 0.0
        %625 = vmatpush1.msra.mxu0 0.0
        %626 = vmatprep.subr.mxu0 0.0
        %627 = vmatpush1.msra.mxu0 0.0
        %628 = vmatprep.subr.mxu0 0.0
        %629 = vmatpush1.msra.mxu0 0.0
        %630 = vmatprep.subr.mxu0 0.0
        %631 = vmatpush1.msra.mxu0 0.0
        %632 = vmatprep.subr.mxu0 0.0
        %633 = vmatpush1.msra.mxu0 0.0
        %634 = vmatprep.subr.mxu0 0.0
        %635 = vmatpush1.msra.mxu0 0.0
        %636 = vmatprep.subr.mxu0 0.0
        %637 = vmatpush1.msra.mxu0 0.0
        %638 = vmatprep.subr.mxu0 0.0
        %639 = vmatpush1.msra.mxu0 0.0
        %640 = vmatprep.subr.mxu0 0.0
        %641 = vmatpush1.msra.mxu0 0.0
        %642 = vmatprep.subr.mxu0 0.0
        %643 = vmatpush1.msra.mxu0 0.0
        %644 = vmatprep.subr.mxu0 0.0
        %645 = vmatpush1.msra.mxu0 0.0
        %646 = vmatprep.subr.mxu0 0.0
        %647 = vmatpush1.msra.mxu0 0.0
        %648 = vmatprep.mubr.f32.mxu0 0.0
        %649 = vmatmul.mubr.f32.gmra.mrb[0].mxu0 %v582
        %v650 = vpop.f32.mrb[0].mxu0
        %v651 = vadd.f32 0.0, %v650
        %v652 = vpop.f32.mrb[0].mxu0
        %653 = vdwg.mxu0
        %v655 = vsel %vm297, %v438, 0
        %657 = vmatprep.subr.mxu0 0.0
        %658 = vmatpush1.msra.mxu0 %v295
        %659 = vmatprep.subr.mxu0 0.0
        %660 = vmatpush1.msra.mxu0 %v296
        %661 = vmatprep.subr.mxu0 0.0
        %662 = vmatpush1.msra.mxu0 0.0
        %663 = vmatprep.subr.mxu0 0.0
        %664 = vmatpush1.msra.mxu0 0.0
        %665 = vmatprep.subr.mxu0 0.0
        %666 = vmatpush1.msra.mxu0 0.0
        %667 = vmatprep.subr.mxu0 0.0
        %668 = vmatpush1.msra.mxu0 0.0
        %669 = vmatprep.subr.mxu0 0.0
        %670 = vmatpush1.msra.mxu0 0.0
        %671 = vmatprep.subr.mxu0 0.0
        %672 = vmatpush1.msra.mxu0 0.0
        %673 = vmatprep.subr.mxu0 0.0
        %674 = vmatpush1.msra.mxu0 0.0
        %675 = vmatprep.subr.mxu0 0.0
        %676 = vmatpush1.msra.mxu0 0.0
        %677 = vmatprep.subr.mxu0 0.0
        %678 = vmatpush1.msra.mxu0 0.0
        %679 = vmatprep.subr.mxu0 0.0
        %680 = vmatpush1.msra.mxu0 0.0
        %681 = vmatprep.subr.mxu0 0.0
        %682 = vmatpush1.msra.mxu0 0.0
        %683 = vmatprep.subr.mxu0 0.0
        %684 = vmatpush1.msra.mxu0 0.0
        %685 = vmatprep.subr.mxu0 0.0
        %686 = vmatpush1.msra.mxu0 0.0
        %687 = vmatprep.subr.mxu0 0.0
        %688 = vmatpush1.msra.mxu0 0.0
        %689 = vmatprep.subr.mxu0 0.0
        %690 = vmatpush1.msra.mxu0 0.0
        %691 = vmatprep.subr.mxu0 0.0
        %692 = vmatpush1.msra.mxu0 0.0
        %693 = vmatprep.subr.mxu0 0.0
        %694 = vmatpush1.msra.mxu0 0.0
        %695 = vmatprep.subr.mxu0 0.0
        %696 = vmatpush1.msra.mxu0 0.0
        %697 = vmatprep.subr.mxu0 0.0
        %698 = vmatpush1.msra.mxu0 0.0
        %699 = vmatprep.subr.mxu0 0.0
        %700 = vmatpush1.msra.mxu0 0.0
        %701 = vmatprep.subr.mxu0 0.0
        %702 = vmatpush1.msra.mxu0 0.0
        %703 = vmatprep.subr.mxu0 0.0
        %704 = vmatpush1.msra.mxu0 0.0
        %705 = vmatprep.subr.mxu0 0.0
        %706 = vmatpush1.msra.mxu0 0.0
        %707 = vmatprep.subr.mxu0 0.0
        %708 = vmatpush1.msra.mxu0 0.0
        %709 = vmatprep.subr.mxu0 0.0
        %710 = vmatpush1.msra.mxu0 0.0
        %711 = vmatprep.subr.mxu0 0.0
        %712 = vmatpush1.msra.mxu0 0.0
        %713 = vmatprep.subr.mxu0 0.0
        %714 = vmatpush1.msra.mxu0 0.0
        %715 = vmatprep.subr.mxu0 0.0
        %716 = vmatpush1.msra.mxu0 0.0
        %717 = vmatprep.subr.mxu0 0.0
        %718 = vmatpush1.msra.mxu0 0.0
        %719 = vmatprep.subr.mxu0 0.0
        %720 = vmatpush1.msra.mxu0 0.0
        %721 = vmatprep.mubr.f32.mxu0 0.0
        %722 = vmatmul.mubr.f32.gmra.mrb[0].mxu0 %v655
        %v723 = vpop.f32.mrb[0].mxu0
        %v724 = vadd.f32 0.0, %v723
        %v725 = vpop.f32.mrb[0].mxu0
        %726 = vdwg.mxu0
        %v728 = vsel %vm297, %v508, 0
        %730 = vmatprep.subr.mxu0 0.0
        %731 = vmatpush1.msra.mxu0 %v295
        %732 = vmatprep.subr.mxu0 0.0
        %733 = vmatpush1.msra.mxu0 %v296
        %734 = vmatprep.subr.mxu0 0.0
        %735 = vmatpush1.msra.mxu0 0.0
        %736 = vmatprep.subr.mxu0 0.0
        %737 = vmatpush1.msra.mxu0 0.0
        %738 = vmatprep.subr.mxu0 0.0
        %739 = vmatpush1.msra.mxu0 0.0
        %740 = vmatprep.subr.mxu0 0.0
        %741 = vmatpush1.msra.mxu0 0.0
        %742 = vmatprep.subr.mxu0 0.0
        %743 = vmatpush1.msra.mxu0 0.0
        %744 = vmatprep.subr.mxu0 0.0
        %745 = vmatpush1.msra.mxu0 0.0
        %746 = vmatprep.subr.mxu0 0.0
        %747 = vmatpush1.msra.mxu0 0.0
        %748 = vmatprep.subr.mxu0 0.0
        %749 = vmatpush1.msra.mxu0 0.0
        %750 = vmatprep.subr.mxu0 0.0
        %751 = vmatpush1.msra.mxu0 0.0
        %752 = vmatprep.subr.mxu0 0.0
        %753 = vmatpush1.msra.mxu0 0.0
        %754 = vmatprep.subr.mxu0 0.0
        %755 = vmatpush1.msra.mxu0 0.0
        %756 = vmatprep.subr.mxu0 0.0
        %757 = vmatpush1.msra.mxu0 0.0
        %758 = vmatprep.subr.mxu0 0.0
        %759 = vmatpush1.msra.mxu0 0.0
        %760 = vmatprep.subr.mxu0 0.0
        %761 = vmatpush1.msra.mxu0 0.0
        %762 = vmatprep.subr.mxu0 0.0
        %763 = vmatpush1.msra.mxu0 0.0
        %764 = vmatprep.subr.mxu0 0.0
        %765 = vmatpush1.msra.mxu0 0.0
        %766 = vmatprep.subr.mxu0 0.0
        %767 = vmatpush1.msra.mxu0 0.0
        %768 = vmatprep.subr.mxu0 0.0
        %769 = vmatpush1.msra.mxu0 0.0
        %770 = vmatprep.subr.mxu0 0.0
        %771 = vmatpush1.msra.mxu0 0.0
        %772 = vmatprep.subr.mxu0 0.0
        %773 = vmatpush1.msra.mxu0 0.0
        %774 = vmatprep.subr.mxu0 0.0
        %775 = vmatpush1.msra.mxu0 0.0
        %776 = vmatprep.subr.mxu0 0.0
        %777 = vmatpush1.msra.mxu0 0.0
        %778 = vmatprep.subr.mxu0 0.0
        %779 = vmatpush1.msra.mxu0 0.0
        %780 = vmatprep.subr.mxu0 0.0
        %781 = vmatpush1.msra.mxu0 0.0
        %782 = vmatprep.subr.mxu0 0.0
        %783 = vmatpush1.msra.mxu0 0.0
        %784 = vmatprep.subr.mxu0 0.0
        %785 = vmatpush1.msra.mxu0 0.0
        %786 = vmatprep.subr.mxu0 0.0
        %787 = vmatpush1.msra.mxu0 0.0
        %788 = vmatprep.subr.mxu0 0.0
        %789 = vmatpush1.msra.mxu0 0.0
        %790 = vmatprep.subr.mxu0 0.0
        %791 = vmatpush1.msra.mxu0 0.0
        %792 = vmatprep.subr.mxu0 0.0
        %793 = vmatpush1.msra.mxu0 0.0
        %794 = vmatprep.mubr.f32.mxu0 0.0
        %795 = vmatmul.mubr.f32.gmra.mrb[0].mxu0 %v728
        %v796 = vpop.f32.mrb[0].mxu0
        %v797 = vadd.f32 0.0, %v796
        %v798 = vpop.f32.mrb[0].mxu0
        %799 = vdwg.mxu0
        %v801 = vsel %vm297, %v578, 0
        %803 = vmatprep.subr.mxu0 0.0
        %804 = vmatpush1.msra.mxu0 %v295
        %805 = vmatprep.subr.mxu0 0.0
        %806 = vmatpush1.msra.mxu0 %v296
        %807 = vmatprep.subr.mxu0 0.0
        %808 = vmatpush1.msra.mxu0 0.0
        %809 = vmatprep.subr.mxu0 0.0
        %810 = vmatpush1.msra.mxu0 0.0
        %811 = vmatprep.subr.mxu0 0.0
        %812 = vmatpush1.msra.mxu0 0.0
        %813 = vmatprep.subr.mxu0 0.0
        %814 = vmatpush1.msra.mxu0 0.0
        %815 = vmatprep.subr.mxu0 0.0
        %816 = vmatpush1.msra.mxu0 0.0
        %817 = vmatprep.subr.mxu0 0.0
        %818 = vmatpush1.msra.mxu0 0.0
        %819 = vmatprep.subr.mxu0 0.0
        %820 = vmatpush1.msra.mxu0 0.0
        %821 = vmatprep.subr.mxu0 0.0
        %822 = vmatpush1.msra.mxu0 0.0
        %823 = vmatprep.subr.mxu0 0.0
        %824 = vmatpush1.msra.mxu0 0.0
        %825 = vmatprep.subr.mxu0 0.0
        %826 = vmatpush1.msra.mxu0 0.0
        %827 = vmatprep.subr.mxu0 0.0
        %828 = vmatpush1.msra.mxu0 0.0
        %829 = vmatprep.subr.mxu0 0.0
        %830 = vmatpush1.msra.mxu0 0.0
        %831 = vmatprep.subr.mxu0 0.0
        %832 = vmatpush1.msra.mxu0 0.0
        %833 = vmatprep.subr.mxu0 0.0
        %834 = vmatpush1.msra.mxu0 0.0
        %835 = vmatprep.subr.mxu0 0.0
        %836 = vmatpush1.msra.mxu0 0.0
        %837 = vmatprep.subr.mxu0 0.0
        %838 = vmatpush1.msra.mxu0 0.0
        %839 = vmatprep.subr.mxu0 0.0
        %840 = vmatpush1.msra.mxu0 0.0
        %841 = vmatprep.subr.mxu0 0.0
        %842 = vmatpush1.msra.mxu0 0.0
        %843 = vmatprep.subr.mxu0 0.0
        %844 = vmatpush1.msra.mxu0 0.0
        %845 = vmatprep.subr.mxu0 0.0
        %846 = vmatpush1.msra.mxu0 0.0
        %847 = vmatprep.subr.mxu0 0.0
        %848 = vmatpush1.msra.mxu0 0.0
        %849 = vmatprep.subr.mxu0 0.0
        %850 = vmatpush1.msra.mxu0 0.0
        %851 = vmatprep.subr.mxu0 0.0
        %852 = vmatpush1.msra.mxu0 0.0
        %853 = vmatprep.subr.mxu0 0.0
        %854 = vmatpush1.msra.mxu0 0.0
        %855 = vmatprep.subr.mxu0 0.0
        %856 = vmatpush1.msra.mxu0 0.0
        %857 = vmatprep.subr.mxu0 0.0
        %858 = vmatpush1.msra.mxu0 0.0
        %859 = vmatprep.subr.mxu0 0.0
        %860 = vmatpush1.msra.mxu0 0.0
        %861 = vmatprep.subr.mxu0 0.0
        %862 = vmatpush1.msra.mxu0 0.0
        %863 = vmatprep.subr.mxu0 0.0
        %864 = vmatpush1.msra.mxu0 0.0
        %865 = vmatprep.subr.mxu0 0.0
        %866 = vmatpush1.msra.mxu0 0.0
        %867 = vmatprep.mubr.f32.mxu0 0.0
        %868 = vmatmul.mubr.f32.gmra.mrb[0].mxu0 %v801
        %v869 = vpop.f32.mrb[0].mxu0
        %v870 = vadd.f32 0.0, %v869
        %v871 = vpop.f32.mrb[0].mxu0
        %872 = vdwg.mxu0
        %vm873 = vcmask 64512
        %874 = vst.msk [vmem:[%s281] sm:$0xff] %vm873, %v651
        %875 = vst.msk [vmem:[%s281 + $0x8] sm:$0xff] %vm873, %v724
        %876 = vst.msk [vmem:[%s281 + $0x10] sm:$0xff] %vm873, %v797
        %877 = vst.msk [vmem:[%s281 + $0x18] sm:$0xff] %vm873, %v870
        %s878 = smul.u32 %s25, 2
        %s879 = sadd.s32 %s878, %s26
        %s880 = sadd.s32 %s879, %s24
        %s881 = smul.u32 4, %s880
        %p882 = scmp.lt.s32.totalorder %s23, 1
        %s883 = scalar_select %p882, %s23, 1
        %p884 = scmp.lt.s32.totalorder %s881, 15
        %s885 = scalar_select %p884, %s881, 15
        %s886 = smul.addr %s883, 16
        %s887 = sadd.s32 %s885, %s886
        %s888 = smul.addr %s887, 8
        %s889 = scalar_lea.vmem %s3, %s888
        // Predicated region
        $region37: #{tpu_custom_call.1} parent=31 // pred_check
          %p890 = pneg %p149
        $region38: #{tpu_custom_call.1} parent=31 // pred_check_branch
          %892 = sbr.rel (%p890) target = $region40
        $region39: #{tpu_custom_call.1} parent=31 // pred_region
          %s893 = smul.u32 %s25, 2
          %s894 = sadd.s32 %s893, %s26
          %s895 = sadd.s32 %s894, %s24
          %s896 = smul.u32 4, %s895
        $region40: #{tpu_custom_call.1} parent=31 // pred_fallthru
          _
      $region32: #{tpu_custom_call.1} parent=5 // pred_fallthru
        _
      %p897 = scmp.le.s32.totalorder 2, %s12
      // Predicated region
      $region41: #{tpu_custom_call.1} parent=5 // pred_check
        %p898 = pneg %p897
      $region42: #{tpu_custom_call.1} parent=5 // pred_check_branch
        %900 = sbr.rel (%p898) target = $region44
      $region43: #{tpu_custom_call.1} parent=5 // pred_region
        %s901 = ssub.s32 %s12, 2
        // Predicated region
        $region45: #{tpu_custom_call.1} parent=43 // pred_check
          %p902 = pneg %p155
        $region46: #{tpu_custom_call.1} parent=43 // pred_check_branch
          %904 = sbr.rel (%p902) target = $region48
        $region47: #{tpu_custom_call.1} parent=43 // pred_region
          %s905 = smul.u32 %s29, 2
          %s906 = sadd.s32 %s905, %s30
          %s907 = sadd.s32 %s906, %s28
          %s908 = smul.u32 4, %s907
          %p909 = scmp.lt.s32.totalorder %s27, 1
          %s910 = scalar_select %p909, %s27, 1
          %p911 = scmp.lt.s32.totalorder %s908, 15
          %s912 = scalar_select %p911, %s908, 15
          %s913 = smul.addr %s910, 16
          %s914 = sadd.s32 %s912, %s913
          %s915 = smul.addr %s914, 8
          %s916 = scalar_lea.vmem %s3, %s915
        $region48: #{tpu_custom_call.1} parent=43 // pred_fallthru
          _
      $region44: #{tpu_custom_call.1} parent=5 // pred_fallthru
        _
    $region6: #{tpu_custom_call.1} parent=1 // loop_footer
      %s16 = sadd.s32 1, %s12
    $region7: #{tpu_custom_call.1} parent=1 // loop_footer_branch
      %11 = sbr.rel target = $region3
    $region8: #{tpu_custom_call.1} parent=1 // loop_exit
      _
    %917 = vsyncpa [#allocation3], 1
    %s918 = scalar_lea.sflag [#allocation3], 1
    %919 = vsyncpa %s918, 1

</llo_original>
